<compile_context>
chip_gen: v6e
topology: v6e:2x2x1
jax: 0.10.0
libtpu: 0.0.40
codegen_flags: <defaults>
</compile_context>

<pallas_src>
import jax
import jax.numpy as jnp
from jax.experimental import pallas as pl
from jax.experimental.pallas import tpu as pltpu


def _round_up(x, m):
    return ((x + m - 1) // m) * m


def _grouped_linear_kernel(gid_ref, x_ref, w_ref, b_ref, o_ref, acc_ref):
    # gid_ref: (num_row_tiles,) int32 scalar-prefetch (consumed by index_maps)
    # x_ref:   (tm, tk)       row tile of the packed activations
    # w_ref:   (1, tk, tn)    weight block of the node type owning this row tile
    # b_ref:   (1, 1, tn)     bias block of that node type
    # o_ref:   (tm, tn)       output tile
    # acc_ref: (tm, tn) f32   VMEM accumulator (persists across the K axis)
    k = pl.program_id(2)

    @pl.when(k == 0)
    def _():
        acc_ref[...] = jnp.zeros_like(acc_ref)

    acc_ref[...] += jnp.dot(
        x_ref[...], w_ref[0], preferred_element_type=jnp.float32
    )

    @pl.when(k == pl.num_programs(2) - 1)
    def _():
        # Bias added once, at finalize (not per K step).
        o_ref[...] = (acc_ref[...] + b_ref[0]).astype(o_ref.dtype)


def grouped_linear(gid, x, w, b, *, tm=256, tn=None, tk=None, out_dtype=None):
    """out[r, :] = x[r, :] @ w[gid[r // tm]] + b[gid[r // tm]].

    x: [N, K_pad]  (N % tm == 0, K_pad % 128 == 0)
    w: [T, K_pad, O_pad]   b: [T, 1, O_pad]   (O_pad % 128 == 0)
    gid: [N // tm] int32 node-type id per row tile.
    """
    n, k_dim = x.shape
    t, k_dim2, o_dim = w.shape
    assert k_dim == k_dim2
    assert n % tm == 0
    if tn is None:  # largest 128-multiple tile that divides O
        tn = 512 if o_dim % 512 == 0 else (256 if o_dim % 256 == 0 else 128)
    if tk is None:  # largest 128-multiple tile that divides K
        tk = 512 if k_dim % 512 == 0 else (256 if k_dim % 256 == 0 else 128)
    assert o_dim % tn == 0 and k_dim % tk == 0
    if out_dtype is None:
        out_dtype = x.dtype

    grid = (n // tm, o_dim // tn, k_dim // tk)

    cost = pl.CostEstimate(
        flops=2 * n * k_dim * o_dim,
        transcendentals=0,
        bytes_accessed=(
            x.size * x.dtype.itemsize
            + w.size * w.dtype.itemsize
            + b.size * b.dtype.itemsize
            + n * o_dim * jnp.dtype(out_dtype).itemsize
        ),
    )

    return pl.pallas_call(
        _grouped_linear_kernel,
        out_shape=jax.ShapeDtypeStruct((n, o_dim), out_dtype),
        grid_spec=pltpu.PrefetchScalarGridSpec(
            num_scalar_prefetch=1,
            grid=grid,
            in_specs=[
                # Packed activations: row tile i, K slice k.
                pl.BlockSpec((tm, tk), lambda i, j, k, gid: (i, k)),
                # Weight block of the node type that owns row tile i.
                pl.BlockSpec((1, tk, tn), lambda i, j, k, gid: (gid[i], k, j)),
                # Bias block of that node type.
                pl.BlockSpec((1, 1, tn), lambda i, j, k, gid: (gid[i], 0, j)),
            ],
            out_specs=pl.BlockSpec((tm, tn), lambda i, j, k, gid: (i, j)),
            scratch_shapes=[pltpu.VMEM((tm, tn), jnp.float32)],
        ),
        compiler_params=pltpu.CompilerParams(
            dimension_semantics=("parallel", "parallel", "arbitrary"),
            vmem_limit_bytes=64 * 1024 * 1024,
        ),
        cost_estimate=cost,
    )(gid, x, w, b)


def glorot_uniform(key, fan_in, fan_out, dtype=jnp.float32):
    a = jnp.sqrt(6.0 / (fan_in + fan_out))
    return jax.random.uniform(key, (fan_in, fan_out), dtype, minval=-a, maxval=a)


def init_hetero_linear(key, in_channels_dict, out_channels):
    """Per-node-type params: weight stored transposed [in, out], bias [out]."""
    params = {}
    for node_type, in_channels in sorted(in_channels_dict.items()):
        key, wk = jax.random.split(key)
        w_t = glorot_uniform(wk, in_channels, out_channels)  # glorot init
        bias = jnp.zeros((out_channels,), jnp.float32)       # zero bias
        params[node_type] = (w_t, bias)
    return params


def hetero_linear_forward(x_dict, params, *, tm=256):
    """Fused forward: one grouped-matmul pallas_call for ALL node types."""
    types = sorted(x_dict.keys())
    out_channels = params[types[0]][0].shape[1]
    k_max = max(params[t][0].shape[0] for t in types)
    k_pad = _round_up(k_max, 128)
    o_pad = _round_up(out_channels, 128)

    compute_dtype = jnp.result_type(
        jnp.float32, *[x_dict[t].dtype for t in types]
    )
    # TODO(synk): optionally cast activations/weights to bf16 on v6e/v7x for
    # MXU throughput (keep the f32 accumulator); kept f32 here for exactness.

    # Pack rows: pad each type to a multiple of tm so row tiles never straddle
    # two node types, and pad features to k_pad lanes with zeros.
    xs, gids, row_ranges = [], [], {}
    row_start = 0
    for t_idx, t in enumerate(types):
        x = x_dict[t].astype(compute_dtype)
        n, k = x.shape
        n_padded = _round_up(max(n, 1), tm)
        xp = jnp.zeros((n_padded, k_pad), compute_dtype).at[:n, :k].set(x)
        xs.append(xp)
        gids.extend([t_idx] * (n_padded // tm))
        row_ranges[t] = (row_start, n)
        row_start += n_padded
    x_all = jnp.concatenate(xs, axis=0)
    gid = jnp.asarray(gids, dtype=jnp.int32)

    # Stack weights/biases into [T, K_pad, O_pad] / [T, 1, O_pad] (zero-padded;
    # extra K rows / O columns contribute nothing and are sliced off below).
    w_all = jnp.zeros((len(types), k_pad, o_pad), compute_dtype)
    b_all = jnp.zeros((len(types), 1, o_pad), compute_dtype)
    for t_idx, t in enumerate(types):
        w_t, bias = params[t]
        w_all = w_all.at[t_idx, : w_t.shape[0], :out_channels].set(
            w_t.astype(compute_dtype)
        )
        b_all = b_all.at[t_idx, 0, :out_channels].set(bias.astype(compute_dtype))

    out_all = grouped_linear(gid, x_all, w_all, b_all, tm=tm,
                             out_dtype=compute_dtype)

    out = {}
    for t in types:
        start, n = row_ranges[t]
        out[t] = out_all[start:start + n, :out_channels]
    return out


if __name__ == "__main__":
    key = jax.random.PRNGKey(0)

    # Small synthetic hetero graph: two node types with different feature dims.
    in_channels_dict = {"paper": 32, "author": 16}
    out_channels = 32
    num_nodes = {"paper": 16, "author": 8}

    params = init_hetero_linear(key, in_channels_dict, out_channels)

    x_dict = {}
    for i, (nt, c_in) in enumerate(sorted(in_channels_dict.items())):
        xk = jax.random.fold_in(key, i + 100)
        x_dict[nt] = jax.random.normal(xk, (num_nodes[nt], c_in), jnp.float32)

    out_dict = hetero_linear_forward(x_dict, params)
    for nt in out_dict:
        jax.block_until_ready(out_dict[nt])

    # Reference check in plain JAX.
    for nt, x in x_dict.items():
        w_t, bias = params[nt]
        ref = x @ w_t + bias
        assert out_dict[nt].shape == (num_nodes[nt], out_channels)
        assert jnp.allclose(out_dict[nt], ref, atol=1e-5, rtol=1e-5)

    print("KERNEL_OK")
</pallas_src>

<mosaic_0001>
module attributes {stable_mosaic.version = 11 : i64} {
  func.func @_grouped_linear_kernel(%arg0: i32, %arg1: i32, %arg2: i32, %arg3: memref<2xi32, #tpu.memory_space<smem>>, %arg4: memref<256x128xf32, #tpu.memory_space<vmem>>, %arg5: memref<1x128x128xf32, #tpu.memory_space<vmem>>, %arg6: memref<1x1x128xf32, #tpu.memory_space<vmem>>, %arg7: memref<256x128xf32, #tpu.memory_space<vmem>>, %arg8: memref<256x128xf32, #tpu.memory_space<vmem>>) attributes {dimension_semantics = [#tpu.dimension_semantics<parallel>, #tpu.dimension_semantics<parallel>, #tpu.dimension_semantics<arbitrary>], iteration_bounds = array<i64: 2, 1, 1>, scalar_prefetch = 1 : i64, scratch_operands = 1 : i64, tpu.core_type = #tpu.core_type<tc>, window_params = [{transform_indices = @transform_0, window_bounds = array<i64: 256, 128>}, {transform_indices = @transform_1, window_bounds = array<i64: 1, 128, 128>}, {transform_indices = @transform_2, window_bounds = array<i64: 1, 1, 128>}, {transform_indices = @transform_3, window_bounds = array<i64: 256, 128>}]} {
    %c0_i32 = arith.constant 0 : i32
    %0 = arith.cmpi eq, %arg2, %c0_i32 : i32
    %1 = arith.extui %0 : i1 to i32
    %c0_i32_0 = arith.constant 0 : i32
    %2 = arith.cmpi ne, %1, %c0_i32_0 : i32
    scf.if %2 {
      %cst_11 = arith.constant 0.000000e+00 : f32
      %13 = vector.broadcast %cst_11 : f32 to vector<256x128xf32>
      %c0_12 = arith.constant 0 : index
      %c0_13 = arith.constant 0 : index
      %14 = vector.load %arg8[%c0_12, %c0_13] : memref<256x128xf32, #tpu.memory_space<vmem>>, vector<256x128xf32>
      tpu.vector_store %arg8[%c0_12, %c0_13], %13 {strides = array<i32>} : memref<256x128xf32, #tpu.memory_space<vmem>>, vector<256x128xf32>,
    } else {
    }
    %c0 = arith.constant 0 : index
    %c0_1 = arith.constant 0 : index
    %3 = vector.load %arg8[%c0, %c0_1] : memref<256x128xf32, #tpu.memory_space<vmem>>, vector<256x128xf32>
    %c0_2 = arith.constant 0 : index
    %c0_3 = arith.constant 0 : index
    %4 = vector.load %arg4[%c0_2, %c0_3] : memref<256x128xf32, #tpu.memory_space<vmem>>, vector<256x128xf32>
    %c0_4 = arith.constant 0 : index
    %c0_5 = arith.constant 0 : index
    %c0_6 = arith.constant 0 : index
    %5 = vector.load %arg5[%c0_4, %c0_5, %c0_6] : memref<1x128x128xf32, #tpu.memory_space<vmem>>, vector<1x128x128xf32>
    %6 = vector.shape_cast %5 : vector<1x128x128xf32> to vector<128x128xf32>
    %cst = arith.constant dense<0.000000e+00> : vector<256x128xf32>
    %7 = tpu.matmul %4, %6, %cst {dimension_numbers = #tpu.dot_dimension_numbers<[1], [0], [0], [1], [0, 0, 1, 1], [], []>} : vector<256x128xf32>, vector<128x128xf32>, vector<256x128xf32> -> vector<256x128xf32>
    %8 = arith.addf %3, %7 : vector<256x128xf32>
    %c0_7 = arith.constant 0 : index
    %c0_8 = arith.constant 0 : index
    %9 = vector.load %arg8[%c0_7, %c0_8] : memref<256x128xf32, #tpu.memory_space<vmem>>, vector<256x128xf32>
    tpu.vector_store %arg8[%c0_7, %c0_8], %8 {strides = array<i32>} : memref<256x128xf32, #tpu.memory_space<vmem>>, vector<256x128xf32>,
    %c0_i32_9 = arith.constant 0 : i32
    %10 = arith.cmpi eq, %arg2, %c0_i32_9 : i32
    %11 = arith.extui %10 : i1 to i32
    %c0_i32_10 = arith.constant 0 : i32
    %12 = arith.cmpi ne, %11, %c0_i32_10 : i32
    scf.if %12 {
      %c0_11 = arith.constant 0 : index
      %c0_12 = arith.constant 0 : index
      %13 = vector.load %arg8[%c0_11, %c0_12] : memref<256x128xf32, #tpu.memory_space<vmem>>, vector<256x128xf32>
      %c0_13 = arith.constant 0 : index
      %c0_14 = arith.constant 0 : index
      %c0_15 = arith.constant 0 : index
      %14 = vector.load %arg6[%c0_13, %c0_14, %c0_15] : memref<1x1x128xf32, #tpu.memory_space<vmem>>, vector<1x1x128xf32>
      %15 = vector.shape_cast %14 : vector<1x1x128xf32> to vector<1x128xf32>
      %16 = vector.broadcast %15 : vector<1x128xf32> to vector<256x128xf32>
      %17 = arith.addf %13, %16 : vector<256x128xf32>
      %c0_16 = arith.constant 0 : index
      %c0_17 = arith.constant 0 : index
      %18 = vector.load %arg7[%c0_16, %c0_17] : memref<256x128xf32, #tpu.memory_space<vmem>>, vector<256x128xf32>
      tpu.vector_store %arg7[%c0_16, %c0_17], %17 {strides = array<i32>} : memref<256x128xf32, #tpu.memory_space<vmem>>, vector<256x128xf32>,
    } else {
    }
    return
  }
  func.func @transform_0(%arg0: i32, %arg1: i32, %arg2: i32, %arg3: memref<2xi32, #tpu.memory_space<smem>>) -> (i32, i32) {
    %c0_i32 = arith.constant 0 : i32
    return %arg0, %arg2 : i32, i32
  }
  func.func @transform_1(%arg0: i32, %arg1: i32, %arg2: i32, %arg3: memref<2xi32, #tpu.memory_space<smem>>) -> (i32, i32, i32) {
    %0 = arith.index_cast %arg0 : i32 to index
    %1 = memref.load %arg3[%0] : memref<2xi32, #tpu.memory_space<smem>>
    %c0_i32 = arith.constant 0 : i32
    return %1, %arg2, %arg1 : i32, i32, i32
  }
  func.func @transform_2(%arg0: i32, %arg1: i32, %arg2: i32, %arg3: memref<2xi32, #tpu.memory_space<smem>>) -> (i32, i32, i32) {
    %0 = arith.index_cast %arg0 : i32 to index
    %1 = memref.load %arg3[%0] : memref<2xi32, #tpu.memory_space<smem>>
    %c0_i32 = arith.constant 0 : i32
    %c0_i32_0 = arith.constant 0 : i32
    return %1, %c0_i32, %arg1 : i32, i32, i32
  }
  func.func @transform_3(%arg0: i32, %arg1: i32, %arg2: i32, %arg3: memref<2xi32, #tpu.memory_space<smem>>) -> (i32, i32) {
    %c0_i32 = arith.constant 0 : i32
    return %arg0, %arg1 : i32, i32
  }
}

</mosaic_0001>

<llo_original>
// kernel: tpu_custom_call.1
$region0: #{tpu_custom_call.1}
  #allocation0 [shape = 'u32[]', space=smem, size = 0x4, offset = 0x4, fixed_abs, tag = 'smem constant byte address 0x4 - core index']
  #allocation1 [shape = 'u32[144,128]{1,0:T(1,128)}', space=vmem, size = 0x12000, scoped, tag = 'internal scratch']
  #allocation2 [shape = 'f32[256,128]{1,0:T(8,128)}', space=vmem, size = 0x20000, scoped, tag = 'scratch operand']
  #allocation3 [shape = 's32[1]{0}', space=sflag, size = 0x4, scoped, tag = 'scoped memory for tpu_custom_call.1']
  #allocation4 [shape = 'u8[512]{0}', space=smem, size = 0x200, scoped, tag = 'prefetched SMEM operand 0']
  %s0 = inlined_call_operand.hbm [shape: s32[2], index: 0, kind: input, shape index: {}]
  %s1 = inlined_call_operand.hbm [shape: f32[512,128], index: 1, kind: input, shape index: {}]
  %s2 = inlined_call_operand.hbm [shape: f32[2,128,128], index: 2, kind: input, shape index: {}]
  %s3 = inlined_call_operand.vmem [shape: f32[2,1,128], index: 3, kind: input, shape index: {}]
  %s4 = inlined_call_operand.hbm [shape: f32[512,128], index: 4, kind: output, shape index: {}]
  %s5 = sld [smem:[#allocation0]]
  $region61: #{tpu_custom_call.1} parent=0
    _
  %s7 = ssub.s32 1, %s5
  %s8 = scalar_select 0, %s7, %s5
  %10 = dma.hbm_to_smem %s0, 16, [#allocation4], [#allocation3]
  %11 = dma.done [#allocation3], 16
  %12 = sfence
  $region1: #{tpu_custom_call.1} parent=0
    #allocation5 [shape = 'u8[262144]{0}', space=vmem, size = 0x40000, scoped, tag = 'input window, operand 1']
    #allocation6 [shape = 's32[2]{0}', space=sflag, size = 0x8, scoped, tag = 'scoped memory for tpu_custom_call.1']
    #allocation7 [shape = 's32[2]{0}', space=sflag, size = 0x8, scoped, tag = 'scoped memory for tpu_custom_call.1']
    #allocation8 [shape = 'u8[131072]{0}', space=vmem, size = 0x20000, scoped, tag = 'input window, operand 2']
    #allocation9 [shape = 's32[2]{0}', space=sflag, size = 0x8, scoped, tag = 'scoped memory for tpu_custom_call.1']
    #allocation10 [shape = 'u8[262144]{0}', space=vmem, size = 0x40000, scoped, tag = 'output window, operand 0']
    %13 = vsyncpa [#allocation6], 0
    %s14 = scalar_lea.sflag [#allocation6], 1
    %15 = vsyncpa %s14, 0
    %16 = vsyncpa [#allocation9], 0
    %s17 = scalar_lea.sflag [#allocation9], 1
    %18 = vsyncpa %s17, 0
    %19 = vsyncpa [#allocation7], 0
    %s20 = scalar_lea.sflag [#allocation7], 1
    %21 = vsyncpa %s20, 0
    loop: start=0, step=1, limit=4
    $region2: #{tpu_custom_call.1} parent=1 // loop_pre_header
      _
    $region3: #{tpu_custom_call.1} parent=1 // loop_header
      %s23 = sphi 0, %s27
      %p24 = scmp.ge.s32.totalorder %s23, 4
      %s30 = sphi 0, %s49
      %s31 = sphi 0, %s45
      %s32 = sphi 0, %s41
      %s33 = sphi 0, %s30
      %s34 = sphi 0, %s31
      %s35 = sphi 0, %s32
      %s36 = sphi 0, %s33
      %s37 = sphi 0, %s34
      %s38 = sphi 0, %s35
      %s54 = sphi 0, %s56
      %s57 = sphi 0, %s54
      %s58 = sphi 0, %s57
      %s74 = sphi 0, %s58
      %s86 = sphi 0, %s88
      %s89 = sphi 0, %s86
      %s90 = sphi 0, %s89
      %s106 = sphi 0, %s90
      %s116 = sphi 0, %s118
      %s119 = sphi 0, %s116
      %s120 = sphi 0, %s119
      %s136 = sphi 0, %s120
      %s144 = sphi 0, %s146
      %s147 = sphi 0, %s144
      %s148 = sphi 0, %s147
      %s164 = sphi 0, %s148
    $region4: #{tpu_custom_call.1} parent=1 // loop_header_branch
      %26 = sbr.rel (%p24) target = $region8
    $region5: #{tpu_custom_call.1} parent=1 // loop_body
      %s28 = ssub.s32 %s23, 1
      %s29 = ssub.s32 %s23, 2
      %s39 = sadd.s32 1, %s32
      %p40 = scmp.ge.s32.totalorder %s39, 1
      %s41 = scalar_select %p40, 0, %s39
      %s42 = sadd.s32 1, %s31
      %s43 = scalar_select %p40, %s42, %s31
      %p44 = scmp.ge.s32.totalorder %s43, 1
      %s45 = scalar_select %p44, 0, %s43
      %s46 = sadd.s32 1, %s30
      %s47 = scalar_select %p44, %s46, %s30
      %p48 = scmp.ge.s32.totalorder %s47, 2
      %s49 = scalar_select %p48, 0, %s47
      %s50 = ssub.s32 %s30, %s49
      %s51 = ssub.s32 %s32, %s41
      %s52 = sor.u32 %s50, %s51
      %p53 = scmp.eq.s32.totalorder %s52, 0
      %s55 = sadd.s32 %s54, 1
      %s56 = scalar_select %p53, %s54, %s55
      %p59 = pneg %p53
      %p60 = scmp.eq.s32.totalorder %s23, 1
      %p61 = por %p59, %p60
      %p62 = scmp.ne.s32.totalorder %s54, %s57
      %p63 = scmp.eq.s32.totalorder %s23, 0
      %p64 = por %p62, %p63
      %p65 = scmp.ne.s32.totalorder %s54, %s57
      %p66 = scmp.eq.s32.totalorder %s28, 1
      %p67 = por %p65, %p66
      %p68 = scmp.ne.s32.totalorder %s57, %s58
      %p69 = scmp.eq.s32.totalorder %s28, 0
      %p70 = por %p68, %p69
      %p71 = scmp.ne.s32.totalorder %s57, %s58
      %p72 = scmp.eq.s32.totalorder %s29, 1
      %p73 = por %p71, %p72
      %p75 = scmp.ne.s32.totalorder %s58, %s74
      %p76 = scmp.eq.s32.totalorder %s29, 0
      %p77 = por %p75, %p76
      %s78 = sld [smem:[#allocation4 + %s30]]
      %s79 = sld [smem:[#allocation4 + %s49]]
      %s80 = ssub.s32 %s78, %s79
      %s81 = ssub.s32 %s32, %s41
      %s82 = sor.u32 %s80, %s81
      %s83 = ssub.s32 %s31, %s45
      %s84 = sor.u32 %s82, %s83
      %p85 = scmp.eq.s32.totalorder %s84, 0
      %s87 = sadd.s32 %s86, 1
      %s88 = scalar_select %p85, %s86, %s87
      %p91 = pneg %p85
      %p92 = scmp.eq.s32.totalorder %s23, 1
      %p93 = por %p91, %p92
      %p94 = scmp.ne.s32.totalorder %s86, %s89
      %p95 = scmp.eq.s32.totalorder %s23, 0
      %p96 = por %p94, %p95
      %p97 = scmp.ne.s32.totalorder %s86, %s89
      %p98 = scmp.eq.s32.totalorder %s28, 1
      %p99 = por %p97, %p98
      %p100 = scmp.ne.s32.totalorder %s89, %s90
      %p101 = scmp.eq.s32.totalorder %s28, 0
      %p102 = por %p100, %p101
      %p103 = scmp.ne.s32.totalorder %s89, %s90
      %p104 = scmp.eq.s32.totalorder %s29, 1
      %p105 = por %p103, %p104
      %p107 = scmp.ne.s32.totalorder %s90, %s106
      %p108 = scmp.eq.s32.totalorder %s29, 0
      %p109 = por %p107, %p108
      %s110 = sld [smem:[#allocation4 + %s30]]
      %s111 = sld [smem:[#allocation4 + %s49]]
      %s112 = ssub.s32 %s110, %s111
      %s113 = ssub.s32 %s31, %s45
      %s114 = sor.u32 %s112, %s113
      %p115 = scmp.eq.s32.totalorder %s114, 0
      %s117 = sadd.s32 %s116, 1
      %s118 = scalar_select %p115, %s116, %s117
      %p121 = pneg %p115
      %p122 = scmp.eq.s32.totalorder %s23, 1
      %p123 = por %p121, %p122
      %p124 = scmp.ne.s32.totalorder %s116, %s119
      %p125 = scmp.eq.s32.totalorder %s23, 0
      %p126 = por %p124, %p125
      %p127 = scmp.ne.s32.totalorder %s116, %s119
      %p128 = scmp.eq.s32.totalorder %s28, 1
      %p129 = por %p127, %p128
      %p130 = scmp.ne.s32.totalorder %s119, %s120
      %p131 = scmp.eq.s32.totalorder %s28, 0
      %p132 = por %p130, %p131
      %p133 = scmp.ne.s32.totalorder %s119, %s120
      %p134 = scmp.eq.s32.totalorder %s29, 1
      %p135 = por %p133, %p134
      %p137 = scmp.ne.s32.totalorder %s120, %s136
      %p138 = scmp.eq.s32.totalorder %s29, 0
      %p139 = por %p137, %p138
      %s140 = ssub.s32 %s30, %s49
      %s141 = ssub.s32 %s31, %s45
      %s142 = sor.u32 %s140, %s141
      %p143 = scmp.eq.s32.totalorder %s142, 0
      %s145 = sadd.s32 %s144, 1
      %s146 = scalar_select %p143, %s144, %s145
      %p149 = pneg %p143
      %p150 = scmp.eq.s32.totalorder %s23, 1
      %p151 = por %p149, %p150
      %p152 = scmp.ne.s32.totalorder %s144, %s147
      %p153 = scmp.eq.s32.totalorder %s23, 0
      %p154 = por %p152, %p153
      %p155 = scmp.ne.s32.totalorder %s144, %s147
      %p156 = scmp.eq.s32.totalorder %s28, 1
      %p157 = por %p155, %p156
      %p158 = scmp.ne.s32.totalorder %s147, %s148
      %p159 = scmp.eq.s32.totalorder %s28, 0
      %p160 = por %p158, %p159
      %p161 = scmp.ne.s32.totalorder %s147, %s148
      %p162 = scmp.eq.s32.totalorder %s29, 1
      %p163 = por %p161, %p162
      %p165 = scmp.ne.s32.totalorder %s148, %s164
      %p166 = scmp.eq.s32.totalorder %s29, 0
      %p167 = por %p165, %p166
      %p168 = scmp.le.s32.totalorder 1, %s23
      %p169 = scmp.lt.s32.totalorder %s23, 3
      %p170 = pnand %p168, %p169
      %p171 = pneg %p170
      // Predicated region
      $region9: #{tpu_custom_call.1} parent=5 // pred_check
        _
      $region10: #{tpu_custom_call.1} parent=5 // pred_check_branch
        %173 = sbr.rel (%p170) target = $region12
      $region11: #{tpu_custom_call.1} parent=5 // pred_region
        %s174 = ssub.s32 %s23, 1
      $region12: #{tpu_custom_call.1} parent=5 // pred_fallthru
        _
      %p175 = scmp.lt.s32.totalorder %s23, 2
      // Predicated region
      $region13: #{tpu_custom_call.1} parent=5 // pred_check
        %p176 = pneg %p175
      $region14: #{tpu_custom_call.1} parent=5 // pred_check_branch
        %178 = sbr.rel (%p176) target = $region16
      $region15: #{tpu_custom_call.1} parent=5 // pred_region
        // Predicated region
        $region17: #{tpu_custom_call.1} parent=15 // pred_check
          %p179 = pneg %p64
        $region18: #{tpu_custom_call.1} parent=15 // pred_check_branch
          %181 = sbr.rel (%p179) target = $region20
        $region19: #{tpu_custom_call.1} parent=15 // pred_region
          %s182 = sand.u32 %s54, 1
          %s183 = scalar_lea.sflag [#allocation6], %s182
          %s184 = sand.u32 %s54, 1
          %s185 = smul.addr %s184, 256
          %s186 = scalar_lea.vmem [#allocation5], %s185
          %s187 = smul.u32 32, %s30
          %s189 = ssub.s32 4096, 4096
          %190 = vsyncadd %s183, %s189
          %s191 = sadd.s32 %s32, %s187
          %s192 = smul.addr %s191, 128
          %s193 = scalar_lea.hbm %s1, %s192
          %s194 = sshll.u32 %s186, 4
          %s195 = int_to_ptr.vmem [resolvable:$true] %s194
          %200 = dma.hbm_to_vmem [thread:$0]  %s193, 4096, %s195, %s183, 128, 128, 8
        $region20: #{tpu_custom_call.1} parent=15 // pred_fallthru
          _
        // Predicated region
        $region21: #{tpu_custom_call.1} parent=15 // pred_check
          %p201 = pneg %p96
        $region22: #{tpu_custom_call.1} parent=15 // pred_check_branch
          %203 = sbr.rel (%p201) target = $region24
        $region23: #{tpu_custom_call.1} parent=15 // pred_region
          %s204 = sand.u32 %s86, 1
          %s205 = scalar_lea.sflag [#allocation9], %s204
          %s206 = sand.u32 %s86, 1
          %s207 = smul.addr %s206, 128
          %s208 = scalar_lea.vmem [#allocation8], %s207
          %s209 = sld [smem:[#allocation4 + %s30]]
          %s210 = smul.u32 16, %s32
          %s212 = ssub.s32 2048, 2048
          %213 = vsyncadd %s205, %s212
          %s214 = sadd.s32 %s31, %s210
          %s215 = smul.addr %s209, 16
          %s216 = sadd.s32 %s214, %s215
          %s217 = smul.addr %s216, 128
          %s218 = scalar_lea.hbm %s2, %s217
          %s219 = sshll.u32 %s208, 4
          %s220 = int_to_ptr.vmem [resolvable:$true] %s219
          %225 = dma.hbm_to_vmem [thread:$0]  %s218, 2048, %s220, %s205, 128, 128, 8
        $region24: #{tpu_custom_call.1} parent=15 // pred_fallthru
          _
        // Predicated region
        $region25: #{tpu_custom_call.1} parent=15 // pred_check
          %p226 = pneg %p126
        $region26: #{tpu_custom_call.1} parent=15 // pred_check_branch
          %228 = sbr.rel (%p226) target = $region28
        $region27: #{tpu_custom_call.1} parent=15 // pred_region
          %s229 = sld [smem:[#allocation4 + %s30]]
          %p230 = scmp.lt.s32.totalorder %s229, 1
          %s231 = scalar_select %p230, %s229, 1
          %p232 = scmp.lt.s32.totalorder %s31, 0
          %s233 = scalar_select %p232, %s31, 0
          %s234 = sadd.s32 %s233, %s231
          %s235 = scalar_lea.vmem %s3, %s234
          %s236 = sld [smem:[#allocation4 + %s30]]
        $region28: #{tpu_custom_call.1} parent=15 // pred_fallthru
          _
      $region16: #{tpu_custom_call.1} parent=5 // pred_fallthru
        _
      %p237 = scmp.le.s32.totalorder 1, %s23
      %p238 = scmp.lt.s32.totalorder %s23, 3
      %p239 = pnand %p237, %p238
      %p240 = pneg %p239
      // Predicated region
      $region29: #{tpu_custom_call.1} parent=5 // pred_check
        _
      $region30: #{tpu_custom_call.1} parent=5 // pred_check_branch
        %242 = sbr.rel (%p239) target = $region32
      $region31: #{tpu_custom_call.1} parent=5 // pred_region
        %s243 = ssub.s32 %s23, 1
        %s244 = sand.u32 %s57, 1
        %s245 = scalar_lea.sflag [#allocation6], %s244
        %s246 = sand.u32 %s57, 1
        %s247 = smul.addr %s246, 256
        %s248 = scalar_lea.vmem [#allocation5], %s247
        // Predicated region
        $region33: #{tpu_custom_call.1} parent=31 // pred_check
          %p249 = pneg %p70
        $region34: #{tpu_custom_call.1} parent=31 // pred_check_branch
          %251 = sbr.rel (%p249) target = $region36
        $region35: #{tpu_custom_call.1} parent=31 // pred_region
          %252 = dma.done %s245, 4096
        $region36: #{tpu_custom_call.1} parent=31 // pred_fallthru
          _
        %s253 = sand.u32 %s89, 1
        %s254 = scalar_lea.sflag [#allocation9], %s253
        %s255 = sand.u32 %s89, 1
        %s256 = smul.addr %s255, 128
        %s257 = scalar_lea.vmem [#allocation8], %s256
        // Predicated region
        $region37: #{tpu_custom_call.1} parent=31 // pred_check
          %p258 = pneg %p102
        $region38: #{tpu_custom_call.1} parent=31 // pred_check_branch
          %260 = sbr.rel (%p258) target = $region40
        $region39: #{tpu_custom_call.1} parent=31 // pred_region
          %261 = dma.done %s254, 2048
        $region40: #{tpu_custom_call.1} parent=31 // pred_fallthru
          _
        %s262 = sand.u32 %s57, 1
        %s263 = scalar_lea.sflag [#allocation6], %s262
        %s264 = sand.u32 %s57, 1
        %s265 = smul.addr %s264, 256
        %s266 = scalar_lea.vmem [#allocation5], %s265
        %p267 = pneg %p70
        %p268 = pneg %p67
        %s269 = sand.u32 %s89, 1
        %s270 = scalar_lea.sflag [#allocation9], %s269
        %s271 = sand.u32 %s89, 1
        %s272 = smul.addr %s271, 128
        %s273 = scalar_lea.vmem [#allocation8], %s272
        %p274 = pneg %p102
        %p275 = pneg %p99
        %s276 = sld [smem:[#allocation4 + %s33]]
        %p277 = scmp.lt.s32.totalorder %s276, 1
        %s278 = scalar_select %p277, %s276, 1
        %p279 = scmp.lt.s32.totalorder %s34, 0
        %s280 = scalar_select %p279, %s34, 0
        %s281 = sadd.s32 %s280, %s278
        %s282 = scalar_lea.vmem %s3, %s281
        %p283 = pneg %p132
        %p284 = pneg %p129
        %p285 = pneg %p160
        %p286 = pneg %p157
        %s287 = sand.u32 %s147, 1
        %s288 = scalar_lea.sflag [#allocation7], %s287
        %s289 = sand.u32 %s147, 1
        %s290 = smul.addr %s289, 256
        %s291 = scalar_lea.vmem [#allocation10], %s290
        %s292 = smul.u32 32, %s33
        %s293 = sld [smem:[#allocation4 + %s33]]
        %s294 = smul.u32 16, %s35
        %s295 = sld [smem:[#allocation4 + %s33]]
        %p296 = scmp.lt.s32.totalorder %s295, 1
        %s297 = scalar_select %p296, %s295, 1
        %p298 = scmp.lt.s32.totalorder %s34, 0
        %s299 = scalar_select %p298, %s34, 0
        %s300 = sadd.s32 %s299, %s297
        %s301 = scalar_lea.vmem %s3, %s300
        %s302 = sld [smem:[#allocation4 + %s33]]
        %s303 = smul.u32 32, %s33
        %p304 = scmp.eq.s32.totalorder %s35, 0
        // Predicated region
        $region41: #{tpu_custom_call.1} parent=31 // pred_check
          %p305 = pneg %p304
        $region42: #{tpu_custom_call.1} parent=31 // pred_check_branch
          %307 = sbr.rel (%p305) target = $region44
        $region43: #{tpu_custom_call.1} parent=31 // pred_region
          %308 = vst [vmem:[#allocation2] sm:$0xff] 0.0
          %309 = vst [vmem:[#allocation2 + $0x8] sm:$0xff] 0.0
          %310 = vst [vmem:[#allocation2 + $0x10] sm:$0xff] 0.0
          %311 = vst [vmem:[#allocation2 + $0x18] sm:$0xff] 0.0
          %312 = vst [vmem:[#allocation2 + $0x20] sm:$0xff] 0.0
          %313 = vst [vmem:[#allocation2 + $0x28] sm:$0xff] 0.0
          %314 = vst [vmem:[#allocation2 + $0x30] sm:$0xff] 0.0
          %315 = vst [vmem:[#allocation2 + $0x38] sm:$0xff] 0.0
          %316 = vst [vmem:[#allocation2 + $0x40] sm:$0xff] 0.0
          %317 = vst [vmem:[#allocation2 + $0x48] sm:$0xff] 0.0
          %318 = vst [vmem:[#allocation2 + $0x50] sm:$0xff] 0.0
          %319 = vst [vmem:[#allocation2 + $0x58] sm:$0xff] 0.0
          %320 = vst [vmem:[#allocation2 + $0x60] sm:$0xff] 0.0
          %321 = vst [vmem:[#allocation2 + $0x68] sm:$0xff] 0.0
          %322 = vst [vmem:[#allocation2 + $0x70] sm:$0xff] 0.0
          %323 = vst [vmem:[#allocation2 + $0x78] sm:$0xff] 0.0
          %324 = vst [vmem:[#allocation2 + $0x80] sm:$0xff] 0.0
          %325 = vst [vmem:[#allocation2 + $0x88] sm:$0xff] 0.0
          %326 = vst [vmem:[#allocation2 + $0x90] sm:$0xff] 0.0
          %327 = vst [vmem:[#allocation2 + $0x98] sm:$0xff] 0.0
          %328 = vst [vmem:[#allocation2 + $0xa0] sm:$0xff] 0.0
          %329 = vst [vmem:[#allocation2 + $0xa8] sm:$0xff] 0.0
          %330 = vst [vmem:[#allocation2 + $0xb0] sm:$0xff] 0.0
          %331 = vst [vmem:[#allocation2 + $0xb8] sm:$0xff] 0.0
          %332 = vst [vmem:[#allocation2 + $0xc0] sm:$0xff] 0.0
          %333 = vst [vmem:[#allocation2 + $0xc8] sm:$0xff] 0.0
          %334 = vst [vmem:[#allocation2 + $0xd0] sm:$0xff] 0.0
          %335 = vst [vmem:[#allocation2 + $0xd8] sm:$0xff] 0.0
          %336 = vst [vmem:[#allocation2 + $0xe0] sm:$0xff] 0.0
          %337 = vst [vmem:[#allocation2 + $0xe8] sm:$0xff] 0.0
          %338 = vst [vmem:[#allocation2 + $0xf0] sm:$0xff] 0.0
          %339 = vst [vmem:[#allocation2 + $0xf8] sm:$0xff] 0.0
        $region44: #{tpu_custom_call.1} parent=31 // pred_fallthru
          _
        %v340 = vld [vmem:[#allocation2] sm:$0xff]
        %v341 = vld [vmem:[#allocation2 + $0x8] sm:$0xff]
        %v342 = vld [vmem:[#allocation2 + $0x10] sm:$0xff]
        %v343 = vld [vmem:[#allocation2 + $0x18] sm:$0xff]
        %v344 = vld [vmem:[#allocation2 + $0x20] sm:$0xff]
        %v345 = vld [vmem:[#allocation2 + $0x28] sm:$0xff]
        %v346 = vld [vmem:[#allocation2 + $0x30] sm:$0xff]
        %v347 = vld [vmem:[#allocation2 + $0x38] sm:$0xff]
        %v348 = vld [vmem:[#allocation2 + $0x40] sm:$0xff]
        %v349 = vld [vmem:[#allocation2 + $0x48] sm:$0xff]
        %v350 = vld [vmem:[#allocation2 + $0x50] sm:$0xff]
        %v351 = vld [vmem:[#allocation2 + $0x58] sm:$0xff]
        %v352 = vld [vmem:[#allocation2 + $0x60] sm:$0xff]
        %v353 = vld [vmem:[#allocation2 + $0x68] sm:$0xff]
        %v354 = vld [vmem:[#allocation2 + $0x70] sm:$0xff]
        %v355 = vld [vmem:[#allocation2 + $0x78] sm:$0xff]
        %v356 = vld [vmem:[#allocation2 + $0x80] sm:$0xff]
        %v357 = vld [vmem:[#allocation2 + $0x88] sm:$0xff]
        %v358 = vld [vmem:[#allocation2 + $0x90] sm:$0xff]
        %v359 = vld [vmem:[#allocation2 + $0x98] sm:$0xff]
        %v360 = vld [vmem:[#allocation2 + $0xa0] sm:$0xff]
        %v361 = vld [vmem:[#allocation2 + $0xa8] sm:$0xff]
        %v362 = vld [vmem:[#allocation2 + $0xb0] sm:$0xff]
        %v363 = vld [vmem:[#allocation2 + $0xb8] sm:$0xff]
        %v364 = vld [vmem:[#allocation2 + $0xc0] sm:$0xff]
        %v365 = vld [vmem:[#allocation2 + $0xc8] sm:$0xff]
        %v366 = vld [vmem:[#allocation2 + $0xd0] sm:$0xff]
        %v367 = vld [vmem:[#allocation2 + $0xd8] sm:$0xff]
        %v368 = vld [vmem:[#allocation2 + $0xe0] sm:$0xff]
        %v369 = vld [vmem:[#allocation2 + $0xe8] sm:$0xff]
        %v370 = vld [vmem:[#allocation2 + $0xf0] sm:$0xff]
        %v371 = vld [vmem:[#allocation2 + $0xf8] sm:$0xff]
        %v372 = vld [vmem:[%s248] sm:$0xff]
        %v373 = vld [vmem:[%s248 + $0x8] sm:$0xff]
        %v374 = vld [vmem:[%s248 + $0x10] sm:$0xff]
        %v375 = vld [vmem:[%s248 + $0x18] sm:$0xff]
        %v376 = vld [vmem:[%s248 + $0x20] sm:$0xff]
        %v377 = vld [vmem:[%s248 + $0x28] sm:$0xff]
        %v378 = vld [vmem:[%s248 + $0x30] sm:$0xff]
        %v379 = vld [vmem:[%s248 + $0x38] sm:$0xff]
        %v380 = vld [vmem:[%s248 + $0x40] sm:$0xff]
        %v381 = vld [vmem:[%s248 + $0x48] sm:$0xff]
        %v382 = vld [vmem:[%s248 + $0x50] sm:$0xff]
        %v383 = vld [vmem:[%s248 + $0x58] sm:$0xff]
        %v384 = vld [vmem:[%s248 + $0x60] sm:$0xff]
        %v385 = vld [vmem:[%s248 + $0x68] sm:$0xff]
        %v386 = vld [vmem:[%s248 + $0x70] sm:$0xff]
        %v387 = vld [vmem:[%s248 + $0x78] sm:$0xff]
        %v388 = vld [vmem:[%s248 + $0x80] sm:$0xff]
        %v389 = vld [vmem:[%s248 + $0x88] sm:$0xff]
        %v390 = vld [vmem:[%s248 + $0x90] sm:$0xff]
        %v391 = vld [vmem:[%s248 + $0x98] sm:$0xff]
        %v392 = vld [vmem:[%s248 + $0xa0] sm:$0xff]
        %v393 = vld [vmem:[%s248 + $0xa8] sm:$0xff]
        %v394 = vld [vmem:[%s248 + $0xb0] sm:$0xff]
        %v395 = vld [vmem:[%s248 + $0xb8] sm:$0xff]
        %v396 = vld [vmem:[%s248 + $0xc0] sm:$0xff]
        %v397 = vld [vmem:[%s248 + $0xc8] sm:$0xff]
        %v398 = vld [vmem:[%s248 + $0xd0] sm:$0xff]
        %v399 = vld [vmem:[%s248 + $0xd8] sm:$0xff]
        %v400 = vld [vmem:[%s248 + $0xe0] sm:$0xff]
        %v401 = vld [vmem:[%s248 + $0xe8] sm:$0xff]
        %v402 = vld [vmem:[%s248 + $0xf0] sm:$0xff]
        %v403 = vld [vmem:[%s248 + $0xf8] sm:$0xff]
        %v404 = vld [vmem:[%s257] sm:$0xff]
        %v405 = vld [vmem:[%s257 + $0x8] sm:$0xff]
        %v406 = vld [vmem:[%s257 + $0x10] sm:$0xff]
        %v407 = vld [vmem:[%s257 + $0x18] sm:$0xff]
        %v408 = vld [vmem:[%s257 + $0x20] sm:$0xff]
        %v409 = vld [vmem:[%s257 + $0x28] sm:$0xff]
        %v410 = vld [vmem:[%s257 + $0x30] sm:$0xff]
        %v411 = vld [vmem:[%s257 + $0x38] sm:$0xff]
        %v412 = vld [vmem:[%s257 + $0x40] sm:$0xff]
        %v413 = vld [vmem:[%s257 + $0x48] sm:$0xff]
        %v414 = vld [vmem:[%s257 + $0x50] sm:$0xff]
        %v415 = vld [vmem:[%s257 + $0x58] sm:$0xff]
        %v416 = vld [vmem:[%s257 + $0x60] sm:$0xff]
        %v417 = vld [vmem:[%s257 + $0x68] sm:$0xff]
        %v418 = vld [vmem:[%s257 + $0x70] sm:$0xff]
        %v419 = vld [vmem:[%s257 + $0x78] sm:$0xff]
        %420 = vmatprep.subr.mxu0 0.0
        %421 = vmatpush1.msra.mxu0 %v419
        %422 = vmatprep.subr.mxu0 0.0
        %423 = vmatpush1.msra.mxu0 %v418
        %424 = vmatprep.subr.mxu0 0.0
        %425 = vmatpush1.msra.mxu0 %v417
        %426 = vmatprep.subr.mxu0 0.0
        %427 = vmatpush1.msra.mxu0 %v416
        %428 = vmatprep.subr.mxu0 0.0
        %429 = vmatpush1.msra.mxu0 %v415
        %430 = vmatprep.subr.mxu0 0.0
        %431 = vmatpush1.msra.mxu0 %v414
        %432 = vmatprep.subr.mxu0 0.0
        %433 = vmatpush1.msra.mxu0 %v413
        %434 = vmatprep.subr.mxu0 0.0
        %435 = vmatpush1.msra.mxu0 %v412
        %436 = vmatprep.subr.mxu0 0.0
        %437 = vmatpush1.msra.mxu0 %v411
        %438 = vmatprep.subr.mxu0 0.0
        %439 = vmatpush1.msra.mxu0 %v410
        %440 = vmatprep.subr.mxu0 0.0
        %441 = vmatpush1.msra.mxu0 %v409
        %442 = vmatprep.subr.mxu0 0.0
        %443 = vmatpush1.msra.mxu0 %v408
        %444 = vmatprep.subr.mxu0 0.0
        %445 = vmatpush1.msra.mxu0 %v407
        %446 = vmatprep.subr.mxu0 0.0
        %447 = vmatpush1.msra.mxu0 %v406
        %448 = vmatprep.subr.mxu0 0.0
        %449 = vmatpush1.msra.mxu0 %v405
        %450 = vmatprep.subr.mxu0 0.0
        %451 = vmatpush1.msra.mxu0 %v404
        %452 = vmatprep.subr.mxu0 0.0
        %453 = vmatpush2.msra.mxu0 0.0
        %454 = vmatprep.subr.mxu0 0.0
        %455 = vmatpush2.msra.mxu0 0.0
        %456 = vmatprep.subr.mxu0 0.0
        %457 = vmatpush2.msra.mxu0 0.0
        %458 = vmatprep.subr.mxu0 0.0
        %459 = vmatpush2.msra.mxu0 0.0
        %460 = vmatprep.subr.mxu0 0.0
        %461 = vmatpush2.msra.mxu0 0.0
        %462 = vmatprep.subr.mxu0 0.0
        %463 = vmatpush2.msra.mxu0 0.0
        %464 = vmatprep.subr.mxu0 0.0
        %465 = vmatpush2.msra.mxu0 0.0
        %466 = vmatprep.subr.mxu0 0.0
        %467 = vmatpush2.msra.mxu0 0.0
        %468 = vmatprep.subr.mxu0 0.0
        %469 = vmatpush2.msra.mxu0 0.0
        %470 = vmatprep.subr.mxu0 0.0
        %471 = vmatpush2.msra.mxu0 0.0
        %472 = vmatprep.subr.mxu0 0.0
        %473 = vmatpush2.msra.mxu0 0.0
        %474 = vmatprep.subr.mxu0 0.0
        %475 = vmatpush2.msra.mxu0 0.0
        %476 = vmatprep.subr.mxu0 0.0
        %477 = vmatpush2.msra.mxu0 0.0
        %478 = vmatprep.subr.mxu0 0.0
        %479 = vmatpush2.msra.mxu0 0.0
        %480 = vmatprep.subr.mxu0 0.0
        %481 = vmatpush2.msra.mxu0 0.0
        %482 = vmatprep.subr.mxu0 0.0
        %483 = vmatpush2.msra.mxu0 0.0
        %484 = vmatprep.mubr.f32.mxu0 0.0
        %485 = vmatmul.mubr.f32.gmra.mxu0 %v372
        %v486 = vpop.f32.mrf.mxu0
        %v487 = vadd.f32 0.0, %v486
        %v488 = vpop.f32.mrf.mxu0
        %489 = vmatprep.mubr.f32.mxu0 0.0
        %490 = vmatmul.mubr.f32.gmra.mxu0 %v373
        %v491 = vpop.f32.mrf.mxu0
        %v492 = vadd.f32 0.0, %v491
        %v493 = vpop.f32.mrf.mxu0
        %494 = vmatprep.mubr.f32.mxu0 0.0
        %495 = vmatmul.mubr.f32.gmra.mxu0 %v374
        %v496 = vpop.f32.mrf.mxu0
        %v497 = vadd.f32 0.0, %v496
        %v498 = vpop.f32.mrf.mxu0
        %499 = vmatprep.mubr.f32.mxu0 0.0
        %500 = vmatmul.mubr.f32.gmra.mxu0 %v375
        %v501 = vpop.f32.mrf.mxu0
        %v502 = vadd.f32 0.0, %v501
        %v503 = vpop.f32.mrf.mxu0
        %504 = vmatprep.mubr.f32.mxu0 0.0
        %505 = vmatmul.mubr.f32.gmra.mxu0 %v376
        %v506 = vpop.f32.mrf.mxu0
        %v507 = vadd.f32 0.0, %v506
        %v508 = vpop.f32.mrf.mxu0
        %509 = vmatprep.mubr.f32.mxu0 0.0
        %510 = vmatmul.mubr.f32.gmra.mxu0 %v377
        %v511 = vpop.f32.mrf.mxu0
        %v512 = vadd.f32 0.0, %v511
        %v513 = vpop.f32.mrf.mxu0
        %514 = vmatprep.mubr.f32.mxu0 0.0
        %515 = vmatmul.mubr.f32.gmra.mxu0 %v378
        %v516 = vpop.f32.mrf.mxu0
        %v517 = vadd.f32 0.0, %v516
        %v518 = vpop.f32.mrf.mxu0
        %519 = vmatprep.mubr.f32.mxu0 0.0
        %520 = vmatmul.mubr.f32.gmra.mxu0 %v379
        %v521 = vpop.f32.mrf.mxu0
        %v522 = vadd.f32 0.0, %v521
        %v523 = vpop.f32.mrf.mxu0
        %524 = vmatprep.mubr.f32.mxu0 0.0
        %525 = vmatmul.mubr.f32.gmra.mxu0 %v380
        %v526 = vpop.f32.mrf.mxu0
        %v527 = vadd.f32 0.0, %v526
        %v528 = vpop.f32.mrf.mxu0
        %529 = vmatprep.mubr.f32.mxu0 0.0
        %530 = vmatmul.mubr.f32.gmra.mxu0 %v381
        %v531 = vpop.f32.mrf.mxu0
        %v532 = vadd.f32 0.0, %v531
        %v533 = vpop.f32.mrf.mxu0
        %534 = vmatprep.mubr.f32.mxu0 0.0
        %535 = vmatmul.mubr.f32.gmra.mxu0 %v382
        %v536 = vpop.f32.mrf.mxu0
        %v537 = vadd.f32 0.0, %v536
        %v538 = vpop.f32.mrf.mxu0
        %539 = vmatprep.mubr.f32.mxu0 0.0
        %540 = vmatmul.mubr.f32.gmra.mxu0 %v383
        %v541 = vpop.f32.mrf.mxu0
        %v542 = vadd.f32 0.0, %v541
        %v543 = vpop.f32.mrf.mxu0
        %544 = vmatprep.mubr.f32.mxu0 0.0
        %545 = vmatmul.mubr.f32.gmra.mxu0 %v384
        %v546 = vpop.f32.mrf.mxu0
        %v547 = vadd.f32 0.0, %v546
        %v548 = vpop.f32.mrf.mxu0
        %549 = vmatprep.mubr.f32.mxu0 0.0
        %550 = vmatmul.mubr.f32.gmra.mxu0 %v385
        %v551 = vpop.f32.mrf.mxu0
        %v552 = vadd.f32 0.0, %v551
        %v553 = vpop.f32.mrf.mxu0
        %554 = vmatprep.mubr.f32.mxu0 0.0
        %555 = vmatmul.mubr.f32.gmra.mxu0 %v386
        %v556 = vpop.f32.mrf.mxu0
        %v557 = vadd.f32 0.0, %v556
        %v558 = vpop.f32.mrf.mxu0
        %559 = vmatprep.mubr.f32.mxu0 0.0
        %560 = vmatmul.mubr.f32.gmra.mxu0 %v387
        %v561 = vpop.f32.mrf.mxu0
        %v562 = vadd.f32 0.0, %v561
        %v563 = vpop.f32.mrf.mxu0
        %564 = vmatprep.mubr.f32.mxu0 0.0
        %565 = vmatmul.mubr.f32.gmra.mxu0 %v388
        %v566 = vpop.f32.mrf.mxu0
        %v567 = vadd.f32 0.0, %v566
        %v568 = vpop.f32.mrf.mxu0
        %569 = vmatprep.mubr.f32.mxu0 0.0
        %570 = vmatmul.mubr.f32.gmra.mxu0 %v389
        %v571 = vpop.f32.mrf.mxu0
        %v572 = vadd.f32 0.0, %v571
        %v573 = vpop.f32.mrf.mxu0
        %574 = vmatprep.mubr.f32.mxu0 0.0
        %575 = vmatmul.mubr.f32.gmra.mxu0 %v390
        %v576 = vpop.f32.mrf.mxu0
        %v577 = vadd.f32 0.0, %v576
        %v578 = vpop.f32.mrf.mxu0
        %579 = vmatprep.mubr.f32.mxu0 0.0
        %580 = vmatmul.mubr.f32.gmra.mxu0 %v391
        %v581 = vpop.f32.mrf.mxu0
        %v582 = vadd.f32 0.0, %v581
        %v583 = vpop.f32.mrf.mxu0
        %584 = vmatprep.mubr.f32.mxu0 0.0
        %585 = vmatmul.mubr.f32.gmra.mxu0 %v392
        %v586 = vpop.f32.mrf.mxu0
        %v587 = vadd.f32 0.0, %v586
        %v588 = vpop.f32.mrf.mxu0
        %589 = vmatprep.mubr.f32.mxu0 0.0
        %590 = vmatmul.mubr.f32.gmra.mxu0 %v393
        %v591 = vpop.f32.mrf.mxu0
        %v592 = vadd.f32 0.0, %v591
        %v593 = vpop.f32.mrf.mxu0
        %594 = vmatprep.mubr.f32.mxu0 0.0
        %595 = vmatmul.mubr.f32.gmra.mxu0 %v394
        %v596 = vpop.f32.mrf.mxu0
        %v597 = vadd.f32 0.0, %v596
        %v598 = vpop.f32.mrf.mxu0
        %599 = vmatprep.mubr.f32.mxu0 0.0
        %600 = vmatmul.mubr.f32.gmra.mxu0 %v395
        %v601 = vpop.f32.mrf.mxu0
        %v602 = vadd.f32 0.0, %v601
        %v603 = vpop.f32.mrf.mxu0
        %604 = vmatprep.mubr.f32.mxu0 0.0
        %605 = vmatmul.mubr.f32.gmra.mxu0 %v396
        %v606 = vpop.f32.mrf.mxu0
        %v607 = vadd.f32 0.0, %v606
        %v608 = vpop.f32.mrf.mxu0
        %609 = vmatprep.mubr.f32.mxu0 0.0
        %610 = vmatmul.mubr.f32.gmra.mxu0 %v397
        %v611 = vpop.f32.mrf.mxu0
        %v612 = vadd.f32 0.0, %v611
        %v613 = vpop.f32.mrf.mxu0
        %614 = vmatprep.mubr.f32.mxu0 0.0
        %615 = vmatmul.mubr.f32.gmra.mxu0 %v398
        %v616 = vpop.f32.mrf.mxu0
        %v617 = vadd.f32 0.0, %v616
        %v618 = vpop.f32.mrf.mxu0
        %619 = vmatprep.mubr.f32.mxu0 0.0
        %620 = vmatmul.mubr.f32.gmra.mxu0 %v399
        %v621 = vpop.f32.mrf.mxu0
        %v622 = vadd.f32 0.0, %v621
        %v623 = vpop.f32.mrf.mxu0
        %624 = vmatprep.mubr.f32.mxu0 0.0
        %625 = vmatmul.mubr.f32.gmra.mxu0 %v400
        %v626 = vpop.f32.mrf.mxu0
        %v627 = vadd.f32 0.0, %v626
        %v628 = vpop.f32.mrf.mxu0
        %629 = vmatprep.mubr.f32.mxu0 0.0
        %630 = vmatmul.mubr.f32.gmra.mxu0 %v401
        %v631 = vpop.f32.mrf.mxu0
        %v632 = vadd.f32 0.0, %v631
        %v633 = vpop.f32.mrf.mxu0
        %634 = vmatprep.mubr.f32.mxu0 0.0
        %635 = vmatmul.mubr.f32.gmra.mxu0 %v402
        %v636 = vpop.f32.mrf.mxu0
        %v637 = vadd.f32 0.0, %v636
        %v638 = vpop.f32.mrf.mxu0
        %639 = vmatprep.mubr.f32.mxu0 0.0
        %640 = vmatmul.mubr.f32.gmra.mxu0 %v403
        %v641 = vpop.f32.mrf.mxu0
        %v642 = vadd.f32 0.0, %v641
        %v643 = vpop.f32.mrf.mxu0
        %644 = vdwg.mxu0
        %v645 = vadd.f32 %v340, %v487
        %v646 = vadd.f32 %v341, %v492
        %v647 = vadd.f32 %v342, %v497
        %v648 = vadd.f32 %v343, %v502
        %v649 = vadd.f32 %v344, %v507
        %v650 = vadd.f32 %v345, %v512
        %v651 = vadd.f32 %v346, %v517
        %v652 = vadd.f32 %v347, %v522
        %v653 = vadd.f32 %v348, %v527
        %v654 = vadd.f32 %v349, %v532
        %v655 = vadd.f32 %v350, %v537
        %v656 = vadd.f32 %v351, %v542
        %v657 = vadd.f32 %v352, %v547
        %v658 = vadd.f32 %v353, %v552
        %v659 = vadd.f32 %v354, %v557
        %v660 = vadd.f32 %v355, %v562
        %v661 = vadd.f32 %v356, %v567
        %v662 = vadd.f32 %v357, %v572
        %v663 = vadd.f32 %v358, %v577
        %v664 = vadd.f32 %v359, %v582
        %v665 = vadd.f32 %v360, %v587
        %v666 = vadd.f32 %v361, %v592
        %v667 = vadd.f32 %v362, %v597
        %v668 = vadd.f32 %v363, %v602
        %v669 = vadd.f32 %v364, %v607
        %v670 = vadd.f32 %v365, %v612
        %v671 = vadd.f32 %v366, %v617
        %v672 = vadd.f32 %v367, %v622
        %v673 = vadd.f32 %v368, %v627
        %v674 = vadd.f32 %v369, %v632
        %v675 = vadd.f32 %v370, %v637
        %v676 = vadd.f32 %v371, %v642
        %677 = vst [vmem:[#allocation2] sm:$0xff] %v645
        %678 = vst [vmem:[#allocation2 + $0x8] sm:$0xff] %v646
        %679 = vst [vmem:[#allocation2 + $0x10] sm:$0xff] %v647
        %680 = vst [vmem:[#allocation2 + $0x18] sm:$0xff] %v648
        %681 = vst [vmem:[#allocation2 + $0x20] sm:$0xff] %v649
        %682 = vst [vmem:[#allocation2 + $0x28] sm:$0xff] %v650
        %683 = vst [vmem:[#allocation2 + $0x30] sm:$0xff] %v651
        %684 = vst [vmem:[#allocation2 + $0x38] sm:$0xff] %v652
        %685 = vst [vmem:[#allocation2 + $0x40] sm:$0xff] %v653
        %686 = vst [vmem:[#allocation2 + $0x48] sm:$0xff] %v654
        %687 = vst [vmem:[#allocation2 + $0x50] sm:$0xff] %v655
        %688 = vst [vmem:[#allocation2 + $0x58] sm:$0xff] %v656
        %689 = vst [vmem:[#allocation2 + $0x60] sm:$0xff] %v657
        %690 = vst [vmem:[#allocation2 + $0x68] sm:$0xff] %v658
        %691 = vst [vmem:[#allocation2 + $0x70] sm:$0xff] %v659
        %692 = vst [vmem:[#allocation2 + $0x78] sm:$0xff] %v660
        %693 = vst [vmem:[#allocation2 + $0x80] sm:$0xff] %v661
        %694 = vst [vmem:[#allocation2 + $0x88] sm:$0xff] %v662
        %695 = vst [vmem:[#allocation2 + $0x90] sm:$0xff] %v663
        %696 = vst [vmem:[#allocation2 + $0x98] sm:$0xff] %v664
        %697 = vst [vmem:[#allocation2 + $0xa0] sm:$0xff] %v665
        %698 = vst [vmem:[#allocation2 + $0xa8] sm:$0xff] %v666
        %699 = vst [vmem:[#allocation2 + $0xb0] sm:$0xff] %v667
        %700 = vst [vmem:[#allocation2 + $0xb8] sm:$0xff] %v668
        %701 = vst [vmem:[#allocation2 + $0xc0] sm:$0xff] %v669
        %702 = vst [vmem:[#allocation2 + $0xc8] sm:$0xff] %v670
        %703 = vst [vmem:[#allocation2 + $0xd0] sm:$0xff] %v671
        %704 = vst [vmem:[#allocation2 + $0xd8] sm:$0xff] %v672
        %705 = vst [vmem:[#allocation2 + $0xe0] sm:$0xff] %v673
        %706 = vst [vmem:[#allocation2 + $0xe8] sm:$0xff] %v674
        %707 = vst [vmem:[#allocation2 + $0xf0] sm:$0xff] %v675
        %708 = vst [vmem:[#allocation2 + $0xf8] sm:$0xff] %v676
        // Predicated region
        $region45: #{tpu_custom_call.1} parent=31 // pred_check
          %p709 = pneg %p304
        $region46: #{tpu_custom_call.1} parent=31 // pred_check_branch
          %711 = sbr.rel (%p709) target = $region48
        $region47: #{tpu_custom_call.1} parent=31 // pred_region
          %v712 = vld [vmem:[#allocation2] sm:$0xff]
          %v713 = vld [vmem:[#allocation2 + $0x8] sm:$0xff]
          %v714 = vld [vmem:[#allocation2 + $0x10] sm:$0xff]
          %v715 = vld [vmem:[#allocation2 + $0x18] sm:$0xff]
          %v716 = vld [vmem:[#allocation2 + $0x20] sm:$0xff]
          %v717 = vld [vmem:[#allocation2 + $0x28] sm:$0xff]
          %v718 = vld [vmem:[#allocation2 + $0x30] sm:$0xff]
          %v719 = vld [vmem:[#allocation2 + $0x38] sm:$0xff]
          %v720 = vld [vmem:[#allocation2 + $0x40] sm:$0xff]
          %v721 = vld [vmem:[#allocation2 + $0x48] sm:$0xff]
          %v722 = vld [vmem:[#allocation2 + $0x50] sm:$0xff]
          %v723 = vld [vmem:[#allocation2 + $0x58] sm:$0xff]
          %v724 = vld [vmem:[#allocation2 + $0x60] sm:$0xff]
          %v725 = vld [vmem:[#allocation2 + $0x68] sm:$0xff]
          %v726 = vld [vmem:[#allocation2 + $0x70] sm:$0xff]
          %v727 = vld [vmem:[#allocation2 + $0x78] sm:$0xff]
          %v728 = vld [vmem:[#allocation2 + $0x80] sm:$0xff]
          %v729 = vld [vmem:[#allocation2 + $0x88] sm:$0xff]
          %v730 = vld [vmem:[#allocation2 + $0x90] sm:$0xff]
          %v731 = vld [vmem:[#allocation2 + $0x98] sm:$0xff]
          %v732 = vld [vmem:[#allocation2 + $0xa0] sm:$0xff]
          %v733 = vld [vmem:[#allocation2 + $0xa8] sm:$0xff]
          %v734 = vld [vmem:[#allocation2 + $0xb0] sm:$0xff]
          %v735 = vld [vmem:[#allocation2 + $0xb8] sm:$0xff]
          %v736 = vld [vmem:[#allocation2 + $0xc0] sm:$0xff]
          %v737 = vld [vmem:[#allocation2 + $0xc8] sm:$0xff]
          %v738 = vld [vmem:[#allocation2 + $0xd0] sm:$0xff]
          %v739 = vld [vmem:[#allocation2 + $0xd8] sm:$0xff]
          %v740 = vld [vmem:[#allocation2 + $0xe0] sm:$0xff]
          %v741 = vld [vmem:[#allocation2 + $0xe8] sm:$0xff]
          %v742 = vld [vmem:[#allocation2 + $0xf0] sm:$0xff]
          %v743 = vld [vmem:[#allocation2 + $0xf8] sm:$0xff]
          %v744 = vld [vmem:[%s301] sm:$0x1]
          %v746 = vlaneseq
          %v747 = vshrl.u32 %v746, 7
          %v748 = vsub.s32 0, %v747
          %v749 = vrot.slane %v744, %v748
          %v751 = vadd.f32 %v712, %v749
          %v752 = vadd.f32 %v713, %v749
          %v753 = vadd.f32 %v714, %v749
          %v754 = vadd.f32 %v715, %v749
          %v755 = vadd.f32 %v716, %v749
          %v756 = vadd.f32 %v717, %v749
          %v757 = vadd.f32 %v718, %v749
          %v758 = vadd.f32 %v719, %v749
          %v759 = vadd.f32 %v720, %v749
          %v760 = vadd.f32 %v721, %v749
          %v761 = vadd.f32 %v722, %v749
          %v762 = vadd.f32 %v723, %v749
          %v763 = vadd.f32 %v724, %v749
          %v764 = vadd.f32 %v725, %v749
          %v765 = vadd.f32 %v726, %v749
          %v766 = vadd.f32 %v727, %v749
          %v767 = vadd.f32 %v728, %v749
          %v768 = vadd.f32 %v729, %v749
          %v769 = vadd.f32 %v730, %v749
          %v770 = vadd.f32 %v731, %v749
          %v771 = vadd.f32 %v732, %v749
          %v772 = vadd.f32 %v733, %v749
          %v773 = vadd.f32 %v734, %v749
          %v774 = vadd.f32 %v735, %v749
          %v775 = vadd.f32 %v736, %v749
          %v776 = vadd.f32 %v737, %v749
          %v777 = vadd.f32 %v738, %v749
          %v778 = vadd.f32 %v739, %v749
          %v779 = vadd.f32 %v740, %v749
          %v780 = vadd.f32 %v741, %v749
          %v781 = vadd.f32 %v742, %v749
          %v782 = vadd.f32 %v743, %v749
          %783 = vst [vmem:[%s291] sm:$0xff] %v751
          %784 = vst [vmem:[%s291 + $0x8] sm:$0xff] %v752
          %785 = vst [vmem:[%s291 + $0x10] sm:$0xff] %v753
          %786 = vst [vmem:[%s291 + $0x18] sm:$0xff] %v754
          %787 = vst [vmem:[%s291 + $0x20] sm:$0xff] %v755
          %788 = vst [vmem:[%s291 + $0x28] sm:$0xff] %v756
          %789 = vst [vmem:[%s291 + $0x30] sm:$0xff] %v757
          %790 = vst [vmem:[%s291 + $0x38] sm:$0xff] %v758
          %791 = vst [vmem:[%s291 + $0x40] sm:$0xff] %v759
          %792 = vst [vmem:[%s291 + $0x48] sm:$0xff] %v760
          %793 = vst [vmem:[%s291 + $0x50] sm:$0xff] %v761
          %794 = vst [vmem:[%s291 + $0x58] sm:$0xff] %v762
          %795 = vst [vmem:[%s291 + $0x60] sm:$0xff] %v763
          %796 = vst [vmem:[%s291 + $0x68] sm:$0xff] %v764
          %797 = vst [vmem:[%s291 + $0x70] sm:$0xff] %v765
          %798 = vst [vmem:[%s291 + $0x78] sm:$0xff] %v766
          %799 = vst [vmem:[%s291 + $0x80] sm:$0xff] %v767
          %800 = vst [vmem:[%s291 + $0x88] sm:$0xff] %v768
          %801 = vst [vmem:[%s291 + $0x90] sm:$0xff] %v769
          %802 = vst [vmem:[%s291 + $0x98] sm:$0xff] %v770
          %803 = vst [vmem:[%s291 + $0xa0] sm:$0xff] %v771
          %804 = vst [vmem:[%s291 + $0xa8] sm:$0xff] %v772
          %805 = vst [vmem:[%s291 + $0xb0] sm:$0xff] %v773
          %806 = vst [vmem:[%s291 + $0xb8] sm:$0xff] %v774
          %807 = vst [vmem:[%s291 + $0xc0] sm:$0xff] %v775
          %808 = vst [vmem:[%s291 + $0xc8] sm:$0xff] %v776
          %809 = vst [vmem:[%s291 + $0xd0] sm:$0xff] %v777
          %810 = vst [vmem:[%s291 + $0xd8] sm:$0xff] %v778
          %811 = vst [vmem:[%s291 + $0xe0] sm:$0xff] %v779
          %812 = vst [vmem:[%s291 + $0xe8] sm:$0xff] %v780
          %813 = vst [vmem:[%s291 + $0xf0] sm:$0xff] %v781
          %814 = vst [vmem:[%s291 + $0xf8] sm:$0xff] %v782
        $region48: #{tpu_custom_call.1} parent=31 // pred_fallthru
          _
        %s815 = sand.u32 %s147, 1
        %s816 = scalar_lea.sflag [#allocation7], %s815
        %s817 = sand.u32 %s147, 1
        %s818 = smul.addr %s817, 256
        %s819 = scalar_lea.vmem [#allocation10], %s818
        // Predicated region
        $region49: #{tpu_custom_call.1} parent=31 // pred_check
          %p820 = pneg %p157
        $region50: #{tpu_custom_call.1} parent=31 // pred_check_branch
          %822 = sbr.rel (%p820) target = $region52
        $region51: #{tpu_custom_call.1} parent=31 // pred_region
          %s823 = smul.u32 32, %s33
          %s825 = ssub.s32 4096, 4096
          %826 = vsyncadd %s816, %s825
          %s827 = sadd.s32 %s34, %s823
          %s828 = smul.addr %s827, 128
          %s829 = scalar_lea.hbm %s4, %s828
          %s830 = sshll.u32 %s819, 4
          %s831 = int_to_ptr.vmem [resolvable:$true] %s830
          %836 = dma.vmem_to_hbm [thread:$0]  %s831, 4096, %s829, %s816, 128, 128, 8
        $region52: #{tpu_custom_call.1} parent=31 // pred_fallthru
          _
      $region32: #{tpu_custom_call.1} parent=5 // pred_fallthru
        _
      %p837 = scmp.le.s32.totalorder 2, %s23
      // Predicated region
      $region53: #{tpu_custom_call.1} parent=5 // pred_check
        %p838 = pneg %p837
      $region54: #{tpu_custom_call.1} parent=5 // pred_check_branch
        %840 = sbr.rel (%p838) target = $region56
      $region55: #{tpu_custom_call.1} parent=5 // pred_region
        %s841 = ssub.s32 %s23, 2
        // Predicated region
        $region57: #{tpu_custom_call.1} parent=55 // pred_check
          %p842 = pneg %p163
        $region58: #{tpu_custom_call.1} parent=55 // pred_check_branch
          %844 = sbr.rel (%p842) target = $region60
        $region59: #{tpu_custom_call.1} parent=55 // pred_region
          %s845 = sand.u32 %s148, 1
          %s846 = scalar_lea.sflag [#allocation7], %s845
          %s847 = sand.u32 %s148, 1
          %s848 = smul.addr %s847, 256
          %s849 = scalar_lea.vmem [#allocation10], %s848
          %850 = dma.done %s846, 4096
        $region60: #{tpu_custom_call.1} parent=55 // pred_fallthru
          _
      $region56: #{tpu_custom_call.1} parent=5 // pred_fallthru
        _
    $region6: #{tpu_custom_call.1} parent=1 // loop_footer
      %s27 = sadd.s32 1, %s23
    $region7: #{tpu_custom_call.1} parent=1 // loop_footer_branch
      %22 = sbr.rel target = $region3
    $region8: #{tpu_custom_call.1} parent=1 // loop_exit
      _
    %851 = vsyncpa [#allocation6], 1
    %s852 = scalar_lea.sflag [#allocation6], 1
    %853 = vsyncpa %s852, 1
    %854 = vsyncpa [#allocation9], 1
    %s855 = scalar_lea.sflag [#allocation9], 1
    %856 = vsyncpa %s855, 1
    %857 = vsyncpa [#allocation7], 1
    %s858 = scalar_lea.sflag [#allocation7], 1
    %859 = vsyncpa %s858, 1

</llo_original>
